<compile_context>
chip_gen: v5e
topology: v5e:2x2
jax: 0.10.0
libtpu: 0.0.40
codegen_flags: <defaults>
</compile_context>

<pallas_src>
import functools

import jax
import jax.numpy as jnp
from jax import lax
from jax.experimental import pallas as pl
from jax.experimental.pallas import tpu as pltpu

NEG_INF = -1000000000.0


def _round_up(x, m):
    return (x + m - 1) // m * m


@functools.lru_cache(maxsize=1)
def _vmem_limit_bytes():
    # Generation-aware scoped-VMEM limit: ~3/4 of physical VMEM, capped at 100 MiB
    # (v5e/v6e: 96 MiB of 128 MiB; v7x: 48 MiB of 64 MiB). Falls back to 48 MiB.
    try:
        cap = pltpu.get_tpu_info().vmem_capacity_bytes
        return int(min(100 * 1024 * 1024, (cap * 3) // 4))
    except Exception:
        return 48 * 1024 * 1024


def _pick_q_tile(S):
    if S <= 256:
        return S
    for t in (256, 128):
        if S % t == 0:
            return t
    return S


# ----------------------------------------------------------------------------
# Pallas kernels
# ----------------------------------------------------------------------------
def _input_proj_kernel(x_ref, w_ref, b_ref, out_ref):
    # x_ref: (TM, in_dim) bf16, w_ref: (in_dim, Dp) bf16, b_ref: (1, Dp) f32
    out_ref[...] = (
        jnp.dot(x_ref[...], w_ref[...], preferred_element_type=jnp.float32)
        + b_ref[...]
    )


def _aggcn_layer_kernel(x_ref, rel_ref, adj_ref, valid_ref,
                        wqk_ref, wqr_ref, bqk_ref,
                        gw_ref, gb2_ref, lw_ref, lb_ref,
                        out_ref,
                        adj_sc, attn_sc, attn_bf_sc, q_sc, k_sc,
                        outh_sc, acc_sc, invd_sc,
                        *, tq):
    h_id = pl.program_id(1)
    l_id = pl.program_id(2)
    S = attn_sc.shape[0]
    dkp = q_sc.shape[1]

    # ---- per-batch init: zero the output accumulator, stage the domain mask as f32 ----
    @pl.when((h_id == 0) & (l_id == 0))
    def _init_batch():
        acc_sc[...] = jnp.zeros_like(acc_sc)
        adj_sc[...] = adj_ref[0].astype(jnp.float32)

    # ---- per-head attention (MultiHeadAttention.forward + attention()) ----
    @pl.when(l_id == 0)
    def _attention():
        # fused per-head projection: one (S,Dp)x(Dp,2*dkp) MXU pass gives [Q_x | K]
        x_bf = x_ref[0].astype(jnp.bfloat16)
        qk = (jnp.dot(x_bf, wqk_ref[0], preferred_element_type=jnp.float32)
              + bqk_ref[0])                                             # (S, 2*dkp)
        q = qk[:, :dkp] + jnp.dot(rel_ref[0], wqr_ref[0],
                                  preferred_element_type=jnp.float32)   # (S, dkp)
        q_sc[...] = q
        k_sc[...] = qk[:, dkp:].astype(jnp.bfloat16)
        outh_sc[...] = x_ref[0]                                          # GCN carry init

        nq = S // tq
        s_count = float(S)

        def _q_tile(i, carry):
            q0 = pl.multiple_of(i * tq, tq)
            q_t = q_sc[pl.ds(q0, tq), :].astype(jnp.bfloat16)            # (tq, dkp)
            valid_t = valid_ref[0, pl.ds(q0, tq), :]                     # (tq, 1) f32
            invalid_t = valid_t == 0.0
            adj_t = adj_sc[pl.ds(q0, tq), :]                             # (tq, S) f32

            scores = lax.dot_general(q_t, k_sc[...],
                                     (((1,), (1,)), ((), ())),
                                     preferred_element_type=jnp.float32)  # (tq, S)

            # one-pass masked stdzscore; faithful to mymean/mystd: the denominator is
            # the {0,1} query-row mask + 1e-4 (NOT the key count)
            row_sum = jnp.sum(scores, axis=-1, keepdims=True)
            sum_sq = jnp.sum(scores * scores, axis=-1, keepdims=True)
            inv_dd = 1.0 / (valid_t + 1e-4)
            mean = valid_t * row_sum * inv_dd
            sqdev = jnp.maximum(
                sum_sq - 2.0 * mean * row_sum + s_count * mean * mean, 0.0)
            std = jnp.sqrt(valid_t * sqdev * inv_dd + 1e-10) + 1e-4
            z = jnp.where(invalid_t, 0.0, (scores - mean) * (1.0 / std))

            thresh = z < 0.0
            fill = jnp.logical_or(thresh, invalid_t)
            s2 = jnp.where(fill, NEG_INF, z)                             # finite fill!

            # weightsoftmax(s2, adj, mask)
            m = jnp.max(s2, axis=-1, keepdims=True)
            e = jnp.exp(s2 - m) * adj_t
            e = jnp.where(invalid_t, 0.0, e) + 1e-10
            w = e * (1.0 / jnp.sum(e, axis=-1, keepdims=True))

            drop = jnp.logical_or(fill, adj_t == 0.0)
            attn_t = jnp.where(drop, 0.0, w)                             # (tq, S) f32

            attn_sc[pl.ds(q0, tq), :] = attn_t
            invd_sc[pl.ds(q0, tq), :] = 1.0 / (
                jnp.sum(attn_t, axis=-1, keepdims=True) + 1.0)
            return carry

        lax.fori_loop(0, nq, _q_tile, 0)
        attn_bf_sc[...] = attn_sc[...].astype(jnp.bfloat16)

    # ---- MultiGraphConvLayer: one (head, sublayer) step per grid point ----
    out_h = outh_sc[...]
    ax = jnp.dot(attn_bf_sc[...], out_h.astype(jnp.bfloat16),
                 preferred_element_type=jnp.float32)                     # (S, Dp)
    # Linear(Ax) + Linear(out_h) == (Ax + out_h) @ W + 2*b (same nn.Linear both times;
    # bias pre-doubled at packing time)
    axw = (jnp.dot((ax + out_h).astype(jnp.bfloat16), gw_ref[0],
                   preferred_element_type=jnp.float32)
           + gb2_ref[0])
    new_h = jnp.maximum(axw * invd_sc[...], 0.0)                         # ReLU
    outh_sc[...] = new_h
    # block-accumulate the big output Linear instead of concatenating
    acc_sc[...] += jnp.dot(new_h.astype(jnp.bfloat16), lw_ref[0],
                           preferred_element_type=jnp.float32)

    @pl.when((h_id == pl.num_programs(1) - 1) & (l_id == pl.num_programs(2) - 1))
    def _finalize():
        out_ref[0] = x_ref[0] + acc_sc[...] + lb_ref[...]                # residual


# ----------------------------------------------------------------------------
# Python wrappers around pallas_call
# ----------------------------------------------------------------------------
def input_proj(embs_bf16, w, b, *, tile_m=512):
    """input_W_G as a lane-dense, M-tiled GEMM over the collapsed (B*S, in_dim)."""
    B, S, Din = embs_bf16.shape
    Dp = w.shape[1]
    M = B * S
    Mp = _round_up(M, tile_m)
    x2d = jnp.pad(embs_bf16.reshape(M, Din), ((0, Mp - M), (0, 0)))
    out = pl.pallas_call(
        _input_proj_kernel,
        out_shape=jax.ShapeDtypeStruct((Mp, Dp), jnp.float32),
        grid=(Mp // tile_m,),
        in_specs=[
            pl.BlockSpec((tile_m, Din), lambda i: (i, 0)),
            pl.BlockSpec((Din, Dp), lambda i: (0, 0)),
            pl.BlockSpec((1, Dp), lambda i: (0, 0)),
        ],
        out_specs=pl.BlockSpec((tile_m, Dp), lambda i: (i, 0)),
        compiler_params=pltpu.CompilerParams(
            dimension_semantics=("parallel",), vmem_limit_bytes=_vmem_limit_bytes()),
    )(x2d, w, b)
    return out[:M].reshape(B, S, Dp)


def aggcn_layer(x, rel, adj, valid, wqk, wqr, bqk, gw, gb2, lw, lb,
                *, heads, sublayers):
    B, S, Dp = x.shape
    dk2 = wqk.shape[-1]
    dkp = wqr.shape[-1]
    tq = _pick_q_tile(S)
    kernel = functools.partial(_aggcn_layer_kernel, tq=tq)

    return pl.pallas_call(
        kernel,
        out_shape=jax.ShapeDtypeStruct((B, S, Dp), jnp.float32),
        grid=(B, heads, sublayers),
        in_specs=[
            pl.BlockSpec((1, S, Dp), lambda b, h, l: (b, 0, 0)),   # x (layer input) f32
            pl.BlockSpec((1, S, Dp), lambda b, h, l: (b, 0, 0)),   # rel embeddings bf16
            pl.BlockSpec((1, S, S), lambda b, h, l: (b, 0, 0)),    # domain adj bf16
            pl.BlockSpec((1, S, 1), lambda b, h, l: (b, 0, 0)),    # token validity f32
            pl.BlockSpec((1, Dp, dk2), lambda b, h, l: (h, 0, 0)),  # [W_Q(x) | W_K] per head
            pl.BlockSpec((1, Dp, dkp), lambda b, h, l: (h, 0, 0)),  # W_Q(rel) per head
            pl.BlockSpec((1, 1, dk2), lambda b, h, l: (h, 0, 0)),   # [b_Q | b_K] per head
            pl.BlockSpec((1, Dp, Dp),
                         lambda b, h, l: (h * sublayers + l, 0, 0)),  # GCN weight block
            pl.BlockSpec((1, 1, Dp),
                         lambda b, h, l: (h * sublayers + l, 0, 0)),  # 2 * GCN bias
            pl.BlockSpec((1, Dp, Dp),
                         lambda b, h, l: (h * sublayers + l, 0, 0)),  # output-Linear block
            pl.BlockSpec((1, Dp), lambda b, h, l: (0, 0)),            # output-Linear bias
        ],
        out_specs=pl.BlockSpec((1, S, Dp), lambda b, h, l: (b, 0, 0)),
        scratch_shapes=[
            pltpu.VMEM((S, S), jnp.float32),     # staged f32 domain mask
            pltpu.VMEM((S, S), jnp.float32),     # attention weights (f32, q-tiled writes)
            pltpu.VMEM((S, S), jnp.bfloat16),    # attention weights (bf16 for the MXU)
            pltpu.VMEM((S, dkp), jnp.float32),   # Q for current head
            pltpu.VMEM((S, dkp), jnp.bfloat16),  # K for current head
            pltpu.VMEM((S, Dp), jnp.float32),    # GCN sublayer carry
            pltpu.VMEM((S, Dp), jnp.float32),    # output-Linear accumulator
            pltpu.VMEM((S, 1), jnp.float32),     # 1 / (attn row-sum + 1)
        ],
        compiler_params=pltpu.CompilerParams(
            dimension_semantics=("parallel", "arbitrary", "arbitrary"),
            vmem_limit_bytes=_vmem_limit_bytes()),
    )(x, rel, adj, valid, wqk, wqr, bqk, gw, gb2, lw, lb)


# ----------------------------------------------------------------------------
# Parameter init: deterministic, packed per-head / per-(head,sublayer),
# zero-padded to 128 lanes
# ----------------------------------------------------------------------------
def init_params(key, opt, vocab, npos, nner, nrel):
    D = opt['hidden_dim']
    H = opt['heads']
    d_k = D // H
    Dp = _round_up(D, 128)
    dkp = _round_up(d_k, 128)
    in_dim = opt['emb_dim'] + opt['pos_dim'] + opt['ner_dim']
    ks = iter(jax.random.split(key, 128))

    def lin(kin, kout):
        kw, kb = jax.random.split(next(ks))
        s = kin ** -0.5
        w = jax.random.uniform(kw, (kin, kout), jnp.float32, -s, s)
        b = jax.random.uniform(kb, (1, kout), jnp.float32, -s, s)
        return w, b

    def pad2(a, rows, cols):
        return jnp.pad(a, ((0, rows - a.shape[0]), (0, cols - a.shape[1])))

    p = {}
    p['word_emb'] = 0.1 * jax.random.normal(next(ks), (vocab, opt['emb_dim']), jnp.float32)
    p['pos_emb'] = 0.1 * jax.random.normal(next(ks), (npos, opt['pos_dim']), jnp.float32)
    p['ner_emb'] = 0.1 * jax.random.normal(next(ks), (nner, opt['ner_dim']), jnp.float32)
    # relation embeddings shipped bf16 (the kernel only consumes them as bf16 MXU input)
    p['rel_emb'] = pad2(0.1 * jax.random.normal(next(ks), (nrel, D), jnp.float32),
                        nrel, Dp).astype(jnp.bfloat16)

    wg, bg = lin(in_dim, D)
    p['Wg'] = pad2(wg, in_dim, Dp).astype(jnp.bfloat16)
    p['bg'] = pad2(bg, 1, Dp)

    # MultiHeadAttention: W_Q (2D -> D) split into x/rel halves, the x-half fused with
    # W_K into a per-head (Dp, 2*dkp) block so one GEMM fills the 256-wide MXU.
    wq, bq = lin(2 * D, D)
    wk, bk = lin(D, D)
    wqk_list, wqr_list, bqk_list = [], [], []
    for h in range(H):
        sl = slice(h * d_k, (h + 1) * d_k)
        wqx_h = pad2(wq[:D, sl], Dp, dkp)
        wqr_h = pad2(wq[D:, sl], Dp, dkp)
        wk_h = pad2(wk[:, sl], Dp, dkp)
        bq_h = pad2(bq[:, sl], 1, dkp)
        bk_h = pad2(bk[:, sl], 1, dkp)
        wqk_list.append(jnp.concatenate([wqx_h, wk_h], axis=-1))
        wqr_list.append(wqr_h)
        bqk_list.append(jnp.concatenate([bq_h, bk_h], axis=-1))
    p['wqk'] = jnp.stack(wqk_list).astype(jnp.bfloat16)     # (H, Dp, 2*dkp)
    p['wqr'] = jnp.stack(wqr_list).astype(jnp.bfloat16)     # (H, Dp, dkp)
    p['bqk'] = jnp.stack(bqk_list)                          # (H, 1, 2*dkp) f32

    layers = []
    for _ in range(opt['num_layers']):
        for sub in (opt['sublayer_first'], opt['sublayer_second']):
            gw_list, gb2_list = [], []
            for _ in range(H * sub):
                w, b = lin(D, D)
                gw_list.append(pad2(w, Dp, Dp))
                # the SAME Linear is applied to Ax and to x -> bias appears twice;
                # pre-double it so the kernel adds it once.
                gb2_list.append(2.0 * pad2(b, 1, Dp))
            lw, lb = lin(D * H * sub, D)
            lw_blocks = jnp.stack([pad2(lw[i * D:(i + 1) * D, :], Dp, Dp)
                                   for i in range(H * sub)])
            layers.append(dict(
                sublayers=sub,
                gw=jnp.stack(gw_list).astype(jnp.bfloat16),   # (H*sub, Dp, Dp) bf16
                gb2=jnp.stack(gb2_list),                      # (H*sub, 1, Dp) f32
                lw=lw_blocks.astype(jnp.bfloat16),            # (H*sub, Dp, Dp) bf16
                lb=pad2(lb, 1, Dp)))                          # (1, Dp) f32
    p['layers'] = layers
    return p


# ----------------------------------------------------------------------------
# Full forward (embedding gathers / mask construction are plain-JAX glue)
# ----------------------------------------------------------------------------
def aggcn_forward(params, words, pos, ner, deprel, domain, bias_mm, adj, opt):
    D = opt['hidden_dim']

    # --- embeddings ---
    # TODO(synk): ALBERT encoder replaced by a deterministic word-embedding lookup.
    word_embs = jnp.take(params['word_emb'], words, axis=0)            # (B, S, emb)
    word_embs = jnp.einsum('bij,bjd->bid', bias_mm, word_embs)         # bias_mm.bmm(...)
    rel_embs = jnp.take(params['rel_emb'], deprel, axis=0)             # (B, S, Dp) bf16

    embs = [word_embs]
    if opt['pos_dim'] > 0:
        embs.append(jnp.take(params['pos_emb'], pos, axis=0))
    if opt['ner_dim'] > 0:
        embs.append(jnp.take(params['ner_emb'], ner, axis=0))
    embs = jnp.concatenate(embs, axis=-1).astype(jnp.bfloat16)         # (B, S, in_dim)

    # input_W_G (Pallas GEMM kernel, lane-dense output)
    gcn_inputs = input_proj(embs, params['Wg'], params['bg'])          # (B, S, Dp) f32

    # domain mask: (domain @ domain^T != 0) with zeroed diagonal; shipped as bf16
    domain = domain.astype(jnp.float32)
    dm = jnp.einsum('bik,bjk->bij', domain, domain)
    S = dm.shape[-1]
    eye = jnp.eye(S, dtype=jnp.float32)[None]
    domain_mask = jnp.where((dm != 0.0) & (eye == 0.0), 1.0, 0.0).astype(jnp.bfloat16)

    # query-row mask from the dependency adjacency (GCNRelationModel semantics):
    # mask[b, i] = True  <=>  token i has no edges
    pad_mask = (jnp.sum(adj, axis=2) + jnp.sum(adj, axis=1)) == 0      # (B, S) bool
    valid_q = (~pad_mask).astype(jnp.float32)[..., None]               # (B, S, 1) f32

    outputs = gcn_inputs
    for lp in params['layers']:
        outputs = aggcn_layer(outputs, rel_embs, domain_mask, valid_q,
                              params['wqk'], params['wqr'], params['bqk'],
                              lp['gw'], lp['gb2'], lp['lw'], lp['lb'],
                              heads=opt['heads'], sublayers=lp['sublayers'])

    # strip the lane padding before returning
    return outputs[..., :D], pad_mask[..., None], gcn_inputs[..., :D]


# ----------------------------------------------------------------------------
if __name__ == "__main__":
    key = jax.random.PRNGKey(0)
    opt = dict(emb_dim=16, pos_dim=8, ner_dim=8, hidden_dim=32,
               heads=2, num_layers=1, sublayer_first=2, sublayer_second=4)
    B, S = 2, 8
    vocab, npos, nner, nrel, ddim = 50, 10, 8, 12, 3

    keys = jax.random.split(key, 10)
    params = init_params(keys[0], opt, vocab, npos, nner, nrel)

    words = jax.random.randint(keys[1], (B, S), 1, vocab)
    pos = jax.random.randint(keys[2], (B, S), 0, npos)
    ner = jax.random.randint(keys[3], (B, S), 0, nner)
    deprel = jax.random.randint(keys[4], (B, S), 0, nrel)
    domain = jax.random.bernoulli(keys[5], 0.5, (B, S, ddim)).astype(jnp.float32)
    bias_mm = 0.1 * jax.random.normal(keys[6], (B, S, S), jnp.float32) + jnp.eye(S)[None]

    # dependency adjacency; symmetric, with the last token left edge-less to
    # exercise the query-row mask path
    a = jax.random.bernoulli(keys[7], 0.3, (B, S, S))
    adj = (a | jnp.swapaxes(a, 1, 2)).astype(jnp.float32)
    adj = adj.at[:, S - 1, :].set(0.0).at[:, :, S - 1].set(0.0)

    outputs, mask_out, gcn_inputs = aggcn_forward(
        params, words, pos, ner, deprel, domain, bias_mm, adj, opt)
    jax.block_until_ready(outputs)
    assert outputs.shape == (B, S, opt['hidden_dim'])
    assert gcn_inputs.shape == (B, S, opt['hidden_dim'])
    assert bool(jnp.all(jnp.isfinite(outputs)))
    print("KERNEL_OK")
</pallas_src>

<mosaic_0001>
module attributes {stable_mosaic.version = 11 : i64} {
  func.func @_input_proj_kernel(%arg0: i32, %arg1: memref<512x32xbf16, #tpu.memory_space<vmem>>, %arg2: memref<32x128xbf16, #tpu.memory_space<vmem>>, %arg3: memref<1x128xf32, #tpu.memory_space<vmem>>, %arg4: memref<512x128xf32, #tpu.memory_space<vmem>>) attributes {dimension_semantics = [#tpu.dimension_semantics<parallel>], iteration_bounds = array<i64: 1>, scalar_prefetch = 0 : i64, scratch_operands = 0 : i64, tpu.core_type = #tpu.core_type<tc>, window_params = [{transform_indices = @transform_0, window_bounds = array<i64: 512, 32>}, {pipeline_mode = #tpu.pipeline_mode<synchronous>, transform_indices = @transform_1, window_bounds = array<i64: 32, 128>}, {pipeline_mode = #tpu.pipeline_mode<synchronous>, transform_indices = @transform_2, window_bounds = array<i64: 1, 128>}, {transform_indices = @transform_3, window_bounds = array<i64: 512, 128>}]} {
    %c0 = arith.constant 0 : index
    %c0_0 = arith.constant 0 : index
    %0 = vector.load %arg1[%c0, %c0_0] : memref<512x32xbf16, #tpu.memory_space<vmem>>, vector<512x32xbf16>
    %c0_1 = arith.constant 0 : index
    %c0_2 = arith.constant 0 : index
    %1 = vector.load %arg2[%c0_1, %c0_2] : memref<32x128xbf16, #tpu.memory_space<vmem>>, vector<32x128xbf16>
    %cst = arith.constant dense<0.000000e+00> : vector<512x128xf32>
    %2 = tpu.matmul %0, %1, %cst {dimension_numbers = #tpu.dot_dimension_numbers<[1], [0], [0], [1], [0, 0, 1, 1], [], []>} : vector<512x32xbf16>, vector<32x128xbf16>, vector<512x128xf32> -> vector<512x128xf32>
    %c0_3 = arith.constant 0 : index
    %c0_4 = arith.constant 0 : index
    %3 = vector.load %arg3[%c0_3, %c0_4] : memref<1x128xf32, #tpu.memory_space<vmem>>, vector<1x128xf32>
    %4 = vector.broadcast %3 : vector<1x128xf32> to vector<512x128xf32>
    %5 = arith.addf %2, %4 : vector<512x128xf32>
    %c0_5 = arith.constant 0 : index
    %c0_6 = arith.constant 0 : index
    %6 = vector.load %arg4[%c0_5, %c0_6] : memref<512x128xf32, #tpu.memory_space<vmem>>, vector<512x128xf32>
    tpu.vector_store %arg4[%c0_5, %c0_6], %5 {strides = array<i32>} : memref<512x128xf32, #tpu.memory_space<vmem>>, vector<512x128xf32>,
    return
  }
  func.func @transform_0(%arg0: i32) -> (i32, i32) {
    %c0_i32 = arith.constant 0 : i32
    %c0_i32_0 = arith.constant 0 : i32
    return %arg0, %c0_i32 : i32, i32
  }
  func.func @transform_1(%arg0: i32) -> (i32, i32) {
    %c0_i32 = arith.constant 0 : i32
    %c0_i32_0 = arith.constant 0 : i32
    %c0_i32_1 = arith.constant 0 : i32
    return %c0_i32, %c0_i32_0 : i32, i32
  }
  func.func @transform_2(%arg0: i32) -> (i32, i32) {
    %c0_i32 = arith.constant 0 : i32
    %c0_i32_0 = arith.constant 0 : i32
    %c0_i32_1 = arith.constant 0 : i32
    return %c0_i32, %c0_i32_0 : i32, i32
  }
  func.func @transform_3(%arg0: i32) -> (i32, i32) {
    %c0_i32 = arith.constant 0 : i32
    %c0_i32_0 = arith.constant 0 : i32
    return %arg0, %c0_i32 : i32, i32
  }
}

</mosaic_0001>

<llo_original>
// kernel: tpu_custom_call.1
$region0: #{tpu_custom_call.1}
  #allocation0 [shape = 'u32[]', space=smem, size = 0x4, offset = 0x4, fixed_abs, tag = 'smem constant byte address 0x4 - core index']
  #allocation1 [shape = 'u32[72,128]{1,0:T(1,128)}', space=vmem, size = 0x9000, scoped, tag = 'internal scratch']
  %s0 = inlined_call_operand.vmem [shape: bf16[512,32], index: 0, kind: input, shape index: {}]
  %s1 = inlined_call_operand.vmem [shape: bf16[32,128], index: 1, kind: input, shape index: {}]
  %s2 = inlined_call_operand.vmem [shape: f32[1,128], index: 2, kind: input, shape index: {}]
  %s3 = inlined_call_operand.hbm [shape: f32[512,128], index: 3, kind: output, shape index: {}]
  %s4 = sld [smem:[#allocation0]]
  $region22: #{tpu_custom_call.1} parent=0
    _
  %s6 = ssub.s32 1, %s4
  %s7 = scalar_select 0, %s6, %s4
  $region1: #{tpu_custom_call.1} parent=0
    #allocation2 [shape = 'u8[262144]{0}', space=vmem, size = 0x40000, scoped, tag = 'output window, operand 0, single buffered']
    #allocation3 [shape = 's32[1]{0}', space=sflag, size = 0x4, scoped, tag = 'scoped memory for tpu_custom_call.1']
    %8 = vsyncpa [#allocation3], 0
    // Predicated region
    $region2: #{tpu_custom_call.1} parent=1 // pred_check
      _
    $region3: #{tpu_custom_call.1} parent=1 // pred_check_branch
      %10 = sbr.rel (0) target = $region5
    $region4: #{tpu_custom_call.1} parent=1 // pred_region
      _
    $region5: #{tpu_custom_call.1} parent=1 // pred_fallthru
      _
    // Predicated region
    $region6: #{tpu_custom_call.1} parent=1 // pred_check
      _
    $region7: #{tpu_custom_call.1} parent=1 // pred_check_branch
      %12 = sbr.rel (0) target = $region9
    $region8: #{tpu_custom_call.1} parent=1 // pred_region
      _
    $region9: #{tpu_custom_call.1} parent=1 // pred_fallthru
      _
    // Predicated region
    $region10: #{tpu_custom_call.1} parent=1 // pred_check
      _
    $region11: #{tpu_custom_call.1} parent=1 // pred_check_branch
      %14 = sbr.rel (0) target = $region13
    $region12: #{tpu_custom_call.1} parent=1 // pred_region
      _
    $region13: #{tpu_custom_call.1} parent=1 // pred_fallthru
      _
    %v16 = vld [vmem:[%s0] sm:$0xf]
    %v17 = vld [vmem:[%s0 + $0x4] sm:$0xf]
    %v18 = vld [vmem:[%s0 + $0x8] sm:$0xf]
    %v19 = vld [vmem:[%s0 + $0xc] sm:$0xf]
    %v20 = vld [vmem:[%s0 + $0x10] sm:$0xf]
    %v21 = vld [vmem:[%s0 + $0x14] sm:$0xf]
    %v22 = vld [vmem:[%s0 + $0x18] sm:$0xf]
    %v23 = vld [vmem:[%s0 + $0x1c] sm:$0xf]
    %v24 = vld [vmem:[%s0 + $0x20] sm:$0xf]
    %v25 = vld [vmem:[%s0 + $0x24] sm:$0xf]
    %v26 = vld [vmem:[%s0 + $0x28] sm:$0xf]
    %v27 = vld [vmem:[%s0 + $0x2c] sm:$0xf]
    %v28 = vld [vmem:[%s0 + $0x30] sm:$0xf]
    %v29 = vld [vmem:[%s0 + $0x34] sm:$0xf]
    %v30 = vld [vmem:[%s0 + $0x38] sm:$0xf]
    %v31 = vld [vmem:[%s0 + $0x3c] sm:$0xf]
    %v32 = vld [vmem:[%s0 + $0x40] sm:$0xf]
    %v33 = vld [vmem:[%s0 + $0x44] sm:$0xf]
    %v34 = vld [vmem:[%s0 + $0x48] sm:$0xf]
    %v35 = vld [vmem:[%s0 + $0x4c] sm:$0xf]
    %v36 = vld [vmem:[%s0 + $0x50] sm:$0xf]
    %v37 = vld [vmem:[%s0 + $0x54] sm:$0xf]
    %v38 = vld [vmem:[%s0 + $0x58] sm:$0xf]
    %v39 = vld [vmem:[%s0 + $0x5c] sm:$0xf]
    %v40 = vld [vmem:[%s0 + $0x60] sm:$0xf]
    %v41 = vld [vmem:[%s0 + $0x64] sm:$0xf]
    %v42 = vld [vmem:[%s0 + $0x68] sm:$0xf]
    %v43 = vld [vmem:[%s0 + $0x6c] sm:$0xf]
    %v44 = vld [vmem:[%s0 + $0x70] sm:$0xf]
    %v45 = vld [vmem:[%s0 + $0x74] sm:$0xf]
    %v46 = vld [vmem:[%s0 + $0x78] sm:$0xf]
    %v47 = vld [vmem:[%s0 + $0x7c] sm:$0xf]
    %v48 = vld [vmem:[%s0 + $0x80] sm:$0xf]
    %v49 = vld [vmem:[%s0 + $0x84] sm:$0xf]
    %v50 = vld [vmem:[%s0 + $0x88] sm:$0xf]
    %v51 = vld [vmem:[%s0 + $0x8c] sm:$0xf]
    %v52 = vld [vmem:[%s0 + $0x90] sm:$0xf]
    %v53 = vld [vmem:[%s0 + $0x94] sm:$0xf]
    %v54 = vld [vmem:[%s0 + $0x98] sm:$0xf]
    %v55 = vld [vmem:[%s0 + $0x9c] sm:$0xf]
    %v56 = vld [vmem:[%s0 + $0xa0] sm:$0xf]
    %v57 = vld [vmem:[%s0 + $0xa4] sm:$0xf]
    %v58 = vld [vmem:[%s0 + $0xa8] sm:$0xf]
    %v59 = vld [vmem:[%s0 + $0xac] sm:$0xf]
    %v60 = vld [vmem:[%s0 + $0xb0] sm:$0xf]
    %v61 = vld [vmem:[%s0 + $0xb4] sm:$0xf]
    %v62 = vld [vmem:[%s0 + $0xb8] sm:$0xf]
    %v63 = vld [vmem:[%s0 + $0xbc] sm:$0xf]
    %v64 = vld [vmem:[%s0 + $0xc0] sm:$0xf]
    %v65 = vld [vmem:[%s0 + $0xc4] sm:$0xf]
    %v66 = vld [vmem:[%s0 + $0xc8] sm:$0xf]
    %v67 = vld [vmem:[%s0 + $0xcc] sm:$0xf]
    %v68 = vld [vmem:[%s0 + $0xd0] sm:$0xf]
    %v69 = vld [vmem:[%s0 + $0xd4] sm:$0xf]
    %v70 = vld [vmem:[%s0 + $0xd8] sm:$0xf]
    %v71 = vld [vmem:[%s0 + $0xdc] sm:$0xf]
    %v72 = vld [vmem:[%s0 + $0xe0] sm:$0xf]
    %v73 = vld [vmem:[%s0 + $0xe4] sm:$0xf]
    %v74 = vld [vmem:[%s0 + $0xe8] sm:$0xf]
    %v75 = vld [vmem:[%s0 + $0xec] sm:$0xf]
    %v76 = vld [vmem:[%s0 + $0xf0] sm:$0xf]
    %v77 = vld [vmem:[%s0 + $0xf4] sm:$0xf]
    %v78 = vld [vmem:[%s0 + $0xf8] sm:$0xf]
    %v79 = vld [vmem:[%s0 + $0xfc] sm:$0xf]
    %v80 = vld [vmem:[%s1] sm:$0xf]
    %v81 = vld [vmem:[%s1 + $0x4] sm:$0xf]
    %v82 = vld [vmem:[%s1 + $0x8] sm:$0xf]
    %v83 = vld [vmem:[%s1 + $0xc] sm:$0xf]
    %v84 = vld [vmem:[%s2] sm:$0x1]
    %v86 = vperm.slane %v84, 0
    %v152 = vunpack.c.l.b16 %v16
    %v153 = vunpack.c.l.b16 %v17
    %v154 = vunpack.c.l.b16 %v18
    %v155 = vunpack.c.l.b16 %v19
    %v156 = vunpack.c.l.b16 %v20
    %v157 = vunpack.c.l.b16 %v21
    %v158 = vunpack.c.l.b16 %v22
    %v159 = vunpack.c.l.b16 %v23
    %v160 = vunpack.c.l.b16 %v24
    %v161 = vunpack.c.l.b16 %v25
    %v162 = vunpack.c.l.b16 %v26
    %v163 = vunpack.c.l.b16 %v27
    %v164 = vunpack.c.l.b16 %v28
    %v165 = vunpack.c.l.b16 %v29
    %v166 = vunpack.c.l.b16 %v30
    %v167 = vunpack.c.l.b16 %v31
    %v168 = vunpack.c.l.b16 %v32
    %v169 = vunpack.c.l.b16 %v33
    %v170 = vunpack.c.l.b16 %v34
    %v171 = vunpack.c.l.b16 %v35
    %v172 = vunpack.c.l.b16 %v36
    %v173 = vunpack.c.l.b16 %v37
    %v174 = vunpack.c.l.b16 %v38
    %v175 = vunpack.c.l.b16 %v39
    %v176 = vunpack.c.l.b16 %v40
    %v177 = vunpack.c.l.b16 %v41
    %v178 = vunpack.c.l.b16 %v42
    %v179 = vunpack.c.l.b16 %v43
    %v180 = vunpack.c.l.b16 %v44
    %v181 = vunpack.c.l.b16 %v45
    %v182 = vunpack.c.l.b16 %v46
    %v183 = vunpack.c.l.b16 %v47
    %v184 = vunpack.c.l.b16 %v48
    %v185 = vunpack.c.l.b16 %v49
    %v186 = vunpack.c.l.b16 %v50
    %v187 = vunpack.c.l.b16 %v51
    %v188 = vunpack.c.l.b16 %v52
    %v189 = vunpack.c.l.b16 %v53
    %v190 = vunpack.c.l.b16 %v54
    %v191 = vunpack.c.l.b16 %v55
    %v192 = vunpack.c.l.b16 %v56
    %v193 = vunpack.c.l.b16 %v57
    %v194 = vunpack.c.l.b16 %v58
    %v195 = vunpack.c.l.b16 %v59
    %v196 = vunpack.c.l.b16 %v60
    %v197 = vunpack.c.l.b16 %v61
    %v198 = vunpack.c.l.b16 %v62
    %v199 = vunpack.c.l.b16 %v63
    %v200 = vunpack.c.l.b16 %v64
    %v201 = vunpack.c.l.b16 %v65
    %v202 = vunpack.c.l.b16 %v66
    %v203 = vunpack.c.l.b16 %v67
    %v204 = vunpack.c.l.b16 %v68
    %v205 = vunpack.c.l.b16 %v69
    %v206 = vunpack.c.l.b16 %v70
    %v207 = vunpack.c.l.b16 %v71
    %v208 = vunpack.c.l.b16 %v72
    %v209 = vunpack.c.l.b16 %v73
    %v210 = vunpack.c.l.b16 %v74
    %v211 = vunpack.c.l.b16 %v75
    %v212 = vunpack.c.l.b16 %v76
    %v213 = vunpack.c.l.b16 %v77
    %v214 = vunpack.c.l.b16 %v78
    %v215 = vunpack.c.l.b16 %v79
    %v216 = vpack.c.b16 %v153, %v152
    %v217 = vpack.c.b16 %v155, %v154
    %v218 = vpack.c.b16 %v157, %v156
    %v219 = vpack.c.b16 %v159, %v158
    %v220 = vpack.c.b16 %v161, %v160
    %v221 = vpack.c.b16 %v163, %v162
    %v222 = vpack.c.b16 %v165, %v164
    %v223 = vpack.c.b16 %v167, %v166
    %v224 = vpack.c.b16 %v169, %v168
    %v225 = vpack.c.b16 %v171, %v170
    %v226 = vpack.c.b16 %v173, %v172
    %v227 = vpack.c.b16 %v175, %v174
    %v228 = vpack.c.b16 %v177, %v176
    %v229 = vpack.c.b16 %v179, %v178
    %v230 = vpack.c.b16 %v181, %v180
    %v231 = vpack.c.b16 %v183, %v182
    %v232 = vpack.c.b16 %v185, %v184
    %v233 = vpack.c.b16 %v187, %v186
    %v234 = vpack.c.b16 %v189, %v188
    %v235 = vpack.c.b16 %v191, %v190
    %v236 = vpack.c.b16 %v193, %v192
    %v237 = vpack.c.b16 %v195, %v194
    %v238 = vpack.c.b16 %v197, %v196
    %v239 = vpack.c.b16 %v199, %v198
    %v240 = vpack.c.b16 %v201, %v200
    %v241 = vpack.c.b16 %v203, %v202
    %v242 = vpack.c.b16 %v205, %v204
    %v243 = vpack.c.b16 %v207, %v206
    %v244 = vpack.c.b16 %v209, %v208
    %v245 = vpack.c.b16 %v211, %v210
    %v246 = vpack.c.b16 %v213, %v212
    %v247 = vpack.c.b16 %v215, %v214
    %v252 = vunpack.c.l.b16 %v80
    %v253 = vunpack.c.l.b16 %v81
    %v254 = vunpack.c.l.b16 %v82
    %v255 = vunpack.c.l.b16 %v83
    %v256 = vpack.c.b16 %v253, %v252
    %v257 = vpack.c.b16 %v255, %v254
    %vm260 = vcmask 261120
    %v262 = vsel %vm260, %v216, 0
    %v265 = vsel %vm260, %v217, 0
    %v268 = vsel %vm260, %v218, 0
    %v271 = vsel %vm260, %v219, 0
    %v274 = vsel %vm260, %v220, 0
    %v277 = vsel %vm260, %v221, 0
    %v280 = vsel %vm260, %v222, 0
    %v283 = vsel %vm260, %v223, 0
    %v286 = vsel %vm260, %v224, 0
    %v289 = vsel %vm260, %v225, 0
    %v292 = vsel %vm260, %v226, 0
    %v295 = vsel %vm260, %v227, 0
    %v298 = vsel %vm260, %v228, 0
    %v301 = vsel %vm260, %v229, 0
    %v304 = vsel %vm260, %v230, 0
    %v307 = vsel %vm260, %v231, 0
    %v310 = vsel %vm260, %v232, 0
    %v313 = vsel %vm260, %v233, 0
    %v316 = vsel %vm260, %v234, 0
    %v319 = vsel %vm260, %v235, 0
    %v322 = vsel %vm260, %v236, 0
    %v325 = vsel %vm260, %v237, 0
    %v328 = vsel %vm260, %v238, 0
    %v331 = vsel %vm260, %v239, 0
    %v334 = vsel %vm260, %v240, 0
    %v337 = vsel %vm260, %v241, 0
    %v340 = vsel %vm260, %v242, 0
    %v343 = vsel %vm260, %v243, 0
    %v346 = vsel %vm260, %v244, 0
    %v349 = vsel %vm260, %v245, 0
    %v352 = vsel %vm260, %v246, 0
    %v355 = vsel %vm260, %v247, 0
    %357 = vmatpush.bf16.msra.mxu0 0
    %358 = vmatpush.bf16.msra.mxu0 0
    %359 = vmatpush.bf16.msra.mxu0 0
    %360 = vmatpush.bf16.msra.mxu0 0
    %361 = vmatpush.bf16.msra.mxu0 0
    %362 = vmatpush.bf16.msra.mxu0 0
    %363 = vmatpush.bf16.msra.mxu0 %v257
    %364 = vmatpush.bf16.msra.mxu0 %v256
    %365 = vmatmul.bf16.gmra.mxu0 %v262
    %v366 = vpop.f32.mrf.mxu0
    %v367 = vadd.f32 %v86, %v366
    %v368 = vpop.f32.mrf.mxu0
    %v369 = vadd.f32 %v86, %v368
    %370 = vmatmul.bf16.gmra.mxu0 %v265
    %v371 = vpop.f32.mrf.mxu0
    %v372 = vadd.f32 %v86, %v371
    %v373 = vpop.f32.mrf.mxu0
    %v374 = vadd.f32 %v86, %v373
    %375 = vmatmul.bf16.gmra.mxu0 %v268
    %v376 = vpop.f32.mrf.mxu0
    %v377 = vadd.f32 %v86, %v376
    %v378 = vpop.f32.mrf.mxu0
    %v379 = vadd.f32 %v86, %v378
    %380 = vmatmul.bf16.gmra.mxu0 %v271
    %v381 = vpop.f32.mrf.mxu0
    %v382 = vadd.f32 %v86, %v381
    %v383 = vpop.f32.mrf.mxu0
    %v384 = vadd.f32 %v86, %v383
    %385 = vmatmul.bf16.gmra.mxu0 %v274
    %v386 = vpop.f32.mrf.mxu0
    %v387 = vadd.f32 %v86, %v386
    %v388 = vpop.f32.mrf.mxu0
    %v389 = vadd.f32 %v86, %v388
    %390 = vmatmul.bf16.gmra.mxu0 %v277
    %v391 = vpop.f32.mrf.mxu0
    %v392 = vadd.f32 %v86, %v391
    %v393 = vpop.f32.mrf.mxu0
    %v394 = vadd.f32 %v86, %v393
    %395 = vmatmul.bf16.gmra.mxu0 %v280
    %v396 = vpop.f32.mrf.mxu0
    %v397 = vadd.f32 %v86, %v396
    %v398 = vpop.f32.mrf.mxu0
    %v399 = vadd.f32 %v86, %v398
    %400 = vmatmul.bf16.gmra.mxu0 %v283
    %v401 = vpop.f32.mrf.mxu0
    %v402 = vadd.f32 %v86, %v401
    %v403 = vpop.f32.mrf.mxu0
    %v404 = vadd.f32 %v86, %v403
    %405 = vmatmul.bf16.gmra.mxu0 %v286
    %v406 = vpop.f32.mrf.mxu0
    %v407 = vadd.f32 %v86, %v406
    %v408 = vpop.f32.mrf.mxu0
    %v409 = vadd.f32 %v86, %v408
    %410 = vmatmul.bf16.gmra.mxu0 %v289
    %v411 = vpop.f32.mrf.mxu0
    %v412 = vadd.f32 %v86, %v411
    %v413 = vpop.f32.mrf.mxu0
    %v414 = vadd.f32 %v86, %v413
    %415 = vmatmul.bf16.gmra.mxu0 %v292
    %v416 = vpop.f32.mrf.mxu0
    %v417 = vadd.f32 %v86, %v416
    %v418 = vpop.f32.mrf.mxu0
    %v419 = vadd.f32 %v86, %v418
    %420 = vmatmul.bf16.gmra.mxu0 %v295
    %v421 = vpop.f32.mrf.mxu0
    %v422 = vadd.f32 %v86, %v421
    %v423 = vpop.f32.mrf.mxu0
    %v424 = vadd.f32 %v86, %v423
    %425 = vmatmul.bf16.gmra.mxu0 %v298
    %v426 = vpop.f32.mrf.mxu0
    %v427 = vadd.f32 %v86, %v426
    %v428 = vpop.f32.mrf.mxu0
    %v429 = vadd.f32 %v86, %v428
    %430 = vmatmul.bf16.gmra.mxu0 %v301
    %v431 = vpop.f32.mrf.mxu0
    %v432 = vadd.f32 %v86, %v431
    %v433 = vpop.f32.mrf.mxu0
    %v434 = vadd.f32 %v86, %v433
    %435 = vmatmul.bf16.gmra.mxu0 %v304
    %v436 = vpop.f32.mrf.mxu0
    %v437 = vadd.f32 %v86, %v436
    %v438 = vpop.f32.mrf.mxu0
    %v439 = vadd.f32 %v86, %v438
    %440 = vmatmul.bf16.gmra.mxu0 %v307
    %v441 = vpop.f32.mrf.mxu0
    %v442 = vadd.f32 %v86, %v441
    %v443 = vpop.f32.mrf.mxu0
    %v444 = vadd.f32 %v86, %v443
    %445 = vmatmul.bf16.gmra.mxu0 %v310
    %v446 = vpop.f32.mrf.mxu0
    %v447 = vadd.f32 %v86, %v446
    %v448 = vpop.f32.mrf.mxu0
    %v449 = vadd.f32 %v86, %v448
    %450 = vmatmul.bf16.gmra.mxu0 %v313
    %v451 = vpop.f32.mrf.mxu0
    %v452 = vadd.f32 %v86, %v451
    %v453 = vpop.f32.mrf.mxu0
    %v454 = vadd.f32 %v86, %v453
    %455 = vmatmul.bf16.gmra.mxu0 %v316
    %v456 = vpop.f32.mrf.mxu0
    %v457 = vadd.f32 %v86, %v456
    %v458 = vpop.f32.mrf.mxu0
    %v459 = vadd.f32 %v86, %v458
    %460 = vmatmul.bf16.gmra.mxu0 %v319
    %v461 = vpop.f32.mrf.mxu0
    %v462 = vadd.f32 %v86, %v461
    %v463 = vpop.f32.mrf.mxu0
    %v464 = vadd.f32 %v86, %v463
    %465 = vmatmul.bf16.gmra.mxu0 %v322
    %v466 = vpop.f32.mrf.mxu0
    %v467 = vadd.f32 %v86, %v466
    %v468 = vpop.f32.mrf.mxu0
    %v469 = vadd.f32 %v86, %v468
    %470 = vmatmul.bf16.gmra.mxu0 %v325
    %v471 = vpop.f32.mrf.mxu0
    %v472 = vadd.f32 %v86, %v471
    %v473 = vpop.f32.mrf.mxu0
    %v474 = vadd.f32 %v86, %v473
    %475 = vmatmul.bf16.gmra.mxu0 %v328
    %v476 = vpop.f32.mrf.mxu0
    %v477 = vadd.f32 %v86, %v476
    %v478 = vpop.f32.mrf.mxu0
    %v479 = vadd.f32 %v86, %v478
    %480 = vmatmul.bf16.gmra.mxu0 %v331
    %v481 = vpop.f32.mrf.mxu0
    %v482 = vadd.f32 %v86, %v481
    %v483 = vpop.f32.mrf.mxu0
    %v484 = vadd.f32 %v86, %v483
    %485 = vmatmul.bf16.gmra.mxu0 %v334
    %v486 = vpop.f32.mrf.mxu0
    %v487 = vadd.f32 %v86, %v486
    %v488 = vpop.f32.mrf.mxu0
    %v489 = vadd.f32 %v86, %v488
    %490 = vmatmul.bf16.gmra.mxu0 %v337
    %v491 = vpop.f32.mrf.mxu0
    %v492 = vadd.f32 %v86, %v491
    %v493 = vpop.f32.mrf.mxu0
    %v494 = vadd.f32 %v86, %v493
    %495 = vmatmul.bf16.gmra.mxu0 %v340
    %v496 = vpop.f32.mrf.mxu0
    %v497 = vadd.f32 %v86, %v496
    %v498 = vpop.f32.mrf.mxu0
    %v499 = vadd.f32 %v86, %v498
    %500 = vmatmul.bf16.gmra.mxu0 %v343
    %v501 = vpop.f32.mrf.mxu0
    %v502 = vadd.f32 %v86, %v501
    %v503 = vpop.f32.mrf.mxu0
    %v504 = vadd.f32 %v86, %v503
    %505 = vmatmul.bf16.gmra.mxu0 %v346
    %v506 = vpop.f32.mrf.mxu0
    %v507 = vadd.f32 %v86, %v506
    %v508 = vpop.f32.mrf.mxu0
    %v509 = vadd.f32 %v86, %v508
    %510 = vmatmul.bf16.gmra.mxu0 %v349
    %v511 = vpop.f32.mrf.mxu0
    %v512 = vadd.f32 %v86, %v511
    %v513 = vpop.f32.mrf.mxu0
    %v514 = vadd.f32 %v86, %v513
    %515 = vmatmul.bf16.gmra.mxu0 %v352
    %v516 = vpop.f32.mrf.mxu0
    %v517 = vadd.f32 %v86, %v516
    %v518 = vpop.f32.mrf.mxu0
    %v519 = vadd.f32 %v86, %v518
    %520 = vmatmul.bf16.gmra.mxu0 %v355
    %v521 = vpop.f32.mrf.mxu0
    %v522 = vadd.f32 %v86, %v521
    %v523 = vpop.f32.mrf.mxu0
    %v524 = vadd.f32 %v86, %v523
    %525 = vdwg.mxu0
    %526 = vst [vmem:[#allocation2] sm:$0xff] %v367
    %527 = vst [vmem:[#allocation2 + $0x8] sm:$0xff] %v369
    %528 = vst [vmem:[#allocation2 + $0x10] sm:$0xff] %v372
    %529 = vst [vmem:[#allocation2 + $0x18] sm:$0xff] %v374
    %530 = vst [vmem:[#allocation2 + $0x20] sm:$0xff] %v377
    %531 = vst [vmem:[#allocation2 + $0x28] sm:$0xff] %v379
    %532 = vst [vmem:[#allocation2 + $0x30] sm:$0xff] %v382
    %533 = vst [vmem:[#allocation2 + $0x38] sm:$0xff] %v384
    %534 = vst [vmem:[#allocation2 + $0x40] sm:$0xff] %v387
    %535 = vst [vmem:[#allocation2 + $0x48] sm:$0xff] %v389
    %536 = vst [vmem:[#allocation2 + $0x50] sm:$0xff] %v392
    %537 = vst [vmem:[#allocation2 + $0x58] sm:$0xff] %v394
    %538 = vst [vmem:[#allocation2 + $0x60] sm:$0xff] %v397
    %539 = vst [vmem:[#allocation2 + $0x68] sm:$0xff] %v399
    %540 = vst [vmem:[#allocation2 + $0x70] sm:$0xff] %v402
    %541 = vst [vmem:[#allocation2 + $0x78] sm:$0xff] %v404
    %542 = vst [vmem:[#allocation2 + $0x80] sm:$0xff] %v407
    %543 = vst [vmem:[#allocation2 + $0x88] sm:$0xff] %v409
    %544 = vst [vmem:[#allocation2 + $0x90] sm:$0xff] %v412
    %545 = vst [vmem:[#allocation2 + $0x98] sm:$0xff] %v414
    %546 = vst [vmem:[#allocation2 + $0xa0] sm:$0xff] %v417
    %547 = vst [vmem:[#allocation2 + $0xa8] sm:$0xff] %v419
    %548 = vst [vmem:[#allocation2 + $0xb0] sm:$0xff] %v422
    %549 = vst [vmem:[#allocation2 + $0xb8] sm:$0xff] %v424
    %550 = vst [vmem:[#allocation2 + $0xc0] sm:$0xff] %v427
    %551 = vst [vmem:[#allocation2 + $0xc8] sm:$0xff] %v429
    %552 = vst [vmem:[#allocation2 + $0xd0] sm:$0xff] %v432
    %553 = vst [vmem:[#allocation2 + $0xd8] sm:$0xff] %v434
    %554 = vst [vmem:[#allocation2 + $0xe0] sm:$0xff] %v437
    %555 = vst [vmem:[#allocation2 + $0xe8] sm:$0xff] %v439
    %556 = vst [vmem:[#allocation2 + $0xf0] sm:$0xff] %v442
    %557 = vst [vmem:[#allocation2 + $0xf8] sm:$0xff] %v444
    %558 = vst [vmem:[#allocation2 + $0x100] sm:$0xff] %v447
    %559 = vst [vmem:[#allocation2 + $0x108] sm:$0xff] %v449
    %560 = vst [vmem:[#allocation2 + $0x110] sm:$0xff] %v452
    %561 = vst [vmem:[#allocation2 + $0x118] sm:$0xff] %v454
    %562 = vst [vmem:[#allocation2 + $0x120] sm:$0xff] %v457
    %563 = vst [vmem:[#allocation2 + $0x128] sm:$0xff] %v459
    %564 = vst [vmem:[#allocation2 + $0x130] sm:$0xff] %v462
    %565 = vst [vmem:[#allocation2 + $0x138] sm:$0xff] %v464
    %566 = vst [vmem:[#allocation2 + $0x140] sm:$0xff] %v467
    %567 = vst [vmem:[#allocation2 + $0x148] sm:$0xff] %v469
    %568 = vst [vmem:[#allocation2 + $0x150] sm:$0xff] %v472
    %569 = vst [vmem:[#allocation2 + $0x158] sm:$0xff] %v474
    %570 = vst [vmem:[#allocation2 + $0x160] sm:$0xff] %v477
    %571 = vst [vmem:[#allocation2 + $0x168] sm:$0xff] %v479
    %572 = vst [vmem:[#allocation2 + $0x170] sm:$0xff] %v482
    %573 = vst [vmem:[#allocation2 + $0x178] sm:$0xff] %v484
    %574 = vst [vmem:[#allocation2 + $0x180] sm:$0xff] %v487
    %575 = vst [vmem:[#allocation2 + $0x188] sm:$0xff] %v489
    %576 = vst [vmem:[#allocation2 + $0x190] sm:$0xff] %v492
    %577 = vst [vmem:[#allocation2 + $0x198] sm:$0xff] %v494
    %578 = vst [vmem:[#allocation2 + $0x1a0] sm:$0xff] %v497
    %579 = vst [vmem:[#allocation2 + $0x1a8] sm:$0xff] %v499
    %580 = vst [vmem:[#allocation2 + $0x1b0] sm:$0xff] %v502
    %581 = vst [vmem:[#allocation2 + $0x1b8] sm:$0xff] %v504
    %582 = vst [vmem:[#allocation2 + $0x1c0] sm:$0xff] %v507
    %583 = vst [vmem:[#allocation2 + $0x1c8] sm:$0xff] %v509
    %584 = vst [vmem:[#allocation2 + $0x1d0] sm:$0xff] %v512
    %585 = vst [vmem:[#allocation2 + $0x1d8] sm:$0xff] %v514
    %586 = vst [vmem:[#allocation2 + $0x1e0] sm:$0xff] %v517
    %587 = vst [vmem:[#allocation2 + $0x1e8] sm:$0xff] %v519
    %588 = vst [vmem:[#allocation2 + $0x1f0] sm:$0xff] %v522
    %589 = vst [vmem:[#allocation2 + $0x1f8] sm:$0xff] %v524
    // Predicated region
    $region14: #{tpu_custom_call.1} parent=1 // pred_check
      _
    $region15: #{tpu_custom_call.1} parent=1 // pred_check_branch
      %591 = sbr.rel (0) target = $region17
    $region16: #{tpu_custom_call.1} parent=1 // pred_region
      %593 = vsyncadd [#allocation3], 0
      %s594 = sshll.u32 [#allocation2], 4
      %s595 = int_to_ptr.vmem [resolvable:$true] %s594
      %s596 = sshll.u32 %s3, 4
      %s597 = int_to_ptr.hbm [resolvable:$true] %s596
      %602 = dma.vmem_to_hbm [thread:$0]  %s595, 8192, %s597, [#allocation3], 128, 128, 8
    $region17: #{tpu_custom_call.1} parent=1 // pred_fallthru
      _
    // Predicated region
    $region18: #{tpu_custom_call.1} parent=1 // pred_check
      _
    $region19: #{tpu_custom_call.1} parent=1 // pred_check_branch
      %604 = sbr.rel (0) target = $region21
    $region20: #{tpu_custom_call.1} parent=1 // pred_region
      %606 = dma.done [#allocation3], 8192
    $region21: #{tpu_custom_call.1} parent=1 // pred_fallthru
      _
    %607 = vsyncpa [#allocation3], 1

</llo_original>
